<compile_context>
chip_gen: v7x
topology: tpu7x:2x2x1
jax: 0.10.0
libtpu: 0.0.40
codegen_flags: <defaults>
</compile_context>

<pallas_src>
import math

import jax
import jax.numpy as jnp
from jax.experimental import pallas as pl
from jax.experimental.pallas import tpu as pltpu

IN_NODES = 561
HID_NODES = 256
OUT_NODES = 12

OUT_PAD = 128      # 12 -> 128 output columns: lane-dense, unmasked stores
TB_MAX = 1024      # default batch tile (mem-bound kernel: big tile -> HBM roofline)


def _round_up(n, m):
    return ((n + m - 1) // m) * m


def _pick_tb(batch, tb_max=TB_MAX):
    """Batch tile: as large as possible (amortize ~0.35us/grid-step overhead),
    rounded to 16 rows (bf16 sublane packing), and capped so the grid has at
    least 2 steps when the batch allows (v7x megacore sharding)."""
    tb = min(tb_max, _round_up(batch, 16))
    if batch >= 32:                                   # two tiles of >= 16 rows possible
        tb = min(tb, _round_up(pl.cdiv(batch, 2), 16))
    return max(tb, 16)


def _resident_spec(shape):
    """Weight/bias spec: same block every grid step -> stays VMEM-resident.
    Single-buffer it; double-buffering a constant block only wastes VMEM."""
    try:
        return pl.BlockSpec(shape, lambda i: (0, 0), pipeline_mode=pl.Buffered(1))
    except (TypeError, ValueError):   # fallback if this JAX lacks pipeline_mode
        return pl.BlockSpec(shape, lambda i: (0, 0))


def _fc_kernel(x_ref, w1_ref, b1_ref, w2_ref, b2_ref, o_ref):
    # Hidden layer: h = tanh(x @ W1 + b1).
    # bf16 cast of activations happens here (VPU) so the wrapper ships raw f32
    # x straight from HBM. Matmuls accumulate in f32 on the MXU; bias-add and
    # tanh stay in f32 (v5e has no bf16 VPU/EUP).
    x = x_ref[...].astype(jnp.bfloat16)
    h = jnp.dot(x, w1_ref[...], preferred_element_type=jnp.float32)
    h = jnp.tanh(h + b1_ref[...])
    # Dropout(p=0.0) is the identity -- nothing to do.
    # Output layer: o = h @ W2 + b2, stored lane-dense (128 padded cols) as bf16.
    o = jnp.dot(h.astype(jnp.bfloat16), w2_ref[...],
                preferred_element_type=jnp.float32)
    o_ref[...] = (o + b2_ref[...]).astype(o_ref.dtype)


@jax.jit
def fc_forward(x, w1_p, b1_p, w2_p, b2_p):
    """x: (B, 561) f32 -> (B, 12) f32. Params must come from prep_params()."""
    B = x.shape[0]
    tb = _pick_tb(B)
    b_pad = _round_up(B, tb)
    x_p = jnp.pad(x, ((0, b_pad - B), (0, 0))) if b_pad != B else x

    out = pl.pallas_call(
        _fc_kernel,
        out_shape=jax.ShapeDtypeStruct((b_pad, OUT_PAD), jnp.bfloat16),
        grid=(b_pad // tb,),
        in_specs=[
            # Activations: batch-tiled, pipelined/double-buffered, full 561 cols
            # (full-array last dim is a legal, un-padded block).
            pl.BlockSpec((tb, IN_NODES), lambda i: (i, 0)),
            # Weights / biases: VMEM-resident, single-buffered.
            _resident_spec((IN_NODES, HID_NODES)),
            _resident_spec((1, HID_NODES)),
            _resident_spec((HID_NODES, OUT_PAD)),
            _resident_spec((1, OUT_PAD)),
        ],
        out_specs=pl.BlockSpec((tb, OUT_PAD), lambda i: (i, 0)),
        compiler_params=pltpu.CompilerParams(
            dimension_semantics=("parallel",),   # megacore sharding on v7x
            vmem_limit_bytes=32 << 20,           # ~5.5 MiB live at tb=1024; explicit for v5e
        ),
    )(x_p, w1_p, b1_p, w2_p, b2_p)

    # Fused epilogue (same jit): drop batch/column padding, back to f32 like nn.Linear.
    return out[:B, :OUT_NODES].astype(jnp.float32)


def init_fc_params(key, input_nodes=IN_NODES, hidden_nodes=HID_NODES,
                   output_nodes=OUT_NODES):
    """Deterministic init mimicking nn.Linear's U(-1/sqrt(fan_in), 1/sqrt(fan_in)).

    Weights are stored transposed, (in, out), so the kernel computes x @ W.
    """
    k1, k2, k3, k4 = jax.random.split(key, 4)
    bound1 = 1.0 / math.sqrt(input_nodes)
    bound2 = 1.0 / math.sqrt(hidden_nodes)
    w1 = jax.random.uniform(k1, (input_nodes, hidden_nodes), jnp.float32, -bound1, bound1)
    b1 = jax.random.uniform(k2, (hidden_nodes,), jnp.float32, -bound1, bound1)
    w2 = jax.random.uniform(k3, (hidden_nodes, output_nodes), jnp.float32, -bound2, bound2)
    b2 = jax.random.uniform(k4, (output_nodes,), jnp.float32, -bound2, bound2)
    return w1, b1, w2, b2


def prep_params(w1, b1, w2, b2):
    """One-time layout prep: cast weights to bf16, pad output columns 12 -> 128."""
    w1_p = w1.astype(jnp.bfloat16)                               # (561, 256)
    b1_p = b1.reshape(1, HID_NODES).astype(jnp.float32)
    w2_p = jnp.zeros((HID_NODES, OUT_PAD), jnp.bfloat16)
    w2_p = w2_p.at[:, :OUT_NODES].set(w2.astype(jnp.bfloat16))
    b2_p = jnp.zeros((1, OUT_PAD), jnp.float32)
    b2_p = b2_p.at[0, :OUT_NODES].set(b2)
    return w1_p, b1_p, w2_p, b2_p


if __name__ == "__main__":
    key = jax.random.PRNGKey(0)
    k_x, k_p = jax.random.split(key)

    batch = 16
    x = jax.random.normal(k_x, (batch, IN_NODES), jnp.float32)
    w1, b1, w2, b2 = init_fc_params(k_p)
    w1_p, b1_p, w2_p, b2_p = prep_params(w1, b1, w2, b2)

    out = fc_forward(x, w1_p, b1_p, w2_p, b2_p)
    out = jax.block_until_ready(out)

    # Reference in plain f32 JAX (same math as the PyTorch forward).
    # Tolerance reflects the intentional bf16 weight/activation/output path.
    ref = jnp.tanh(x @ w1 + b1) @ w2 + b2
    assert out.shape == (batch, OUT_NODES)
    assert jnp.allclose(out, ref, atol=5e-2, rtol=5e-2), (
        float(jnp.max(jnp.abs(out - ref))))

    print("KERNEL_OK")
</pallas_src>

<mosaic_0001>
module attributes {stable_mosaic.version = 11 : i64} {
  func.func @_fc_kernel(%arg0: i32, %arg1: memref<16x561xf32, #tpu.memory_space<vmem>>, %arg2: memref<561x256xbf16, #tpu.memory_space<vmem>>, %arg3: memref<1x256xf32, #tpu.memory_space<vmem>>, %arg4: memref<256x128xbf16, #tpu.memory_space<vmem>>, %arg5: memref<1x128xf32, #tpu.memory_space<vmem>>, %arg6: memref<16x128xbf16, #tpu.memory_space<vmem>>) attributes {dimension_semantics = [#tpu.dimension_semantics<parallel>], iteration_bounds = array<i64: 1>, scalar_prefetch = 0 : i64, scratch_operands = 0 : i64, tpu.core_type = #tpu.core_type<tc>, window_params = [{transform_indices = @transform_0, window_bounds = array<i64: 16, 561>}, {pipeline_mode = #tpu.pipeline_mode<synchronous>, transform_indices = @transform_1, window_bounds = array<i64: 561, 256>}, {pipeline_mode = #tpu.pipeline_mode<synchronous>, transform_indices = @transform_2, window_bounds = array<i64: 1, 256>}, {pipeline_mode = #tpu.pipeline_mode<synchronous>, transform_indices = @transform_3, window_bounds = array<i64: 256, 128>}, {pipeline_mode = #tpu.pipeline_mode<synchronous>, transform_indices = @transform_4, window_bounds = array<i64: 1, 128>}, {transform_indices = @transform_5, window_bounds = array<i64: 16, 128>}]} {
    %c0 = arith.constant 0 : index
    %c0_0 = arith.constant 0 : index
    %0 = vector.load %arg1[%c0, %c0_0] : memref<16x561xf32, #tpu.memory_space<vmem>>, vector<16x561xf32>
    %1 = arith.truncf %0 : vector<16x561xf32> to vector<16x561xbf16>
    %c0_1 = arith.constant 0 : index
    %c0_2 = arith.constant 0 : index
    %2 = vector.load %arg2[%c0_1, %c0_2] : memref<561x256xbf16, #tpu.memory_space<vmem>>, vector<561x256xbf16>
    %cst = arith.constant dense<0.000000e+00> : vector<16x256xf32>
    %3 = tpu.matmul %1, %2, %cst {dimension_numbers = #tpu.dot_dimension_numbers<[1], [0], [0], [1], [0, 0, 1, 1], [], []>} : vector<16x561xbf16>, vector<561x256xbf16>, vector<16x256xf32> -> vector<16x256xf32>
    %c0_3 = arith.constant 0 : index
    %c0_4 = arith.constant 0 : index
    %4 = vector.load %arg3[%c0_3, %c0_4] : memref<1x256xf32, #tpu.memory_space<vmem>>, vector<1x256xf32>
    %5 = vector.broadcast %4 : vector<1x256xf32> to vector<16x256xf32>
    %6 = arith.addf %3, %5 : vector<16x256xf32>
    %7 = math.tanh %6 : vector<16x256xf32>
    %8 = arith.truncf %7 : vector<16x256xf32> to vector<16x256xbf16>
    %c0_5 = arith.constant 0 : index
    %c0_6 = arith.constant 0 : index
    %9 = vector.load %arg4[%c0_5, %c0_6] : memref<256x128xbf16, #tpu.memory_space<vmem>>, vector<256x128xbf16>
    %cst_7 = arith.constant dense<0.000000e+00> : vector<16x128xf32>
    %10 = tpu.matmul %8, %9, %cst_7 {dimension_numbers = #tpu.dot_dimension_numbers<[1], [0], [0], [1], [0, 0, 1, 1], [], []>} : vector<16x256xbf16>, vector<256x128xbf16>, vector<16x128xf32> -> vector<16x128xf32>
    %c0_8 = arith.constant 0 : index
    %c0_9 = arith.constant 0 : index
    %11 = vector.load %arg5[%c0_8, %c0_9] : memref<1x128xf32, #tpu.memory_space<vmem>>, vector<1x128xf32>
    %12 = vector.broadcast %11 : vector<1x128xf32> to vector<16x128xf32>
    %13 = arith.addf %10, %12 : vector<16x128xf32>
    %14 = arith.truncf %13 : vector<16x128xf32> to vector<16x128xbf16>
    %c0_10 = arith.constant 0 : index
    %c0_11 = arith.constant 0 : index
    %15 = vector.load %arg6[%c0_10, %c0_11] : memref<16x128xbf16, #tpu.memory_space<vmem>>, vector<16x128xbf16>
    tpu.vector_store %arg6[%c0_10, %c0_11], %14 {strides = array<i32>} : memref<16x128xbf16, #tpu.memory_space<vmem>>, vector<16x128xbf16>,
    return
  }
  func.func @transform_0(%arg0: i32) -> (i32, i32) {
    %c0_i32 = arith.constant 0 : i32
    %c0_i32_0 = arith.constant 0 : i32
    return %arg0, %c0_i32 : i32, i32
  }
  func.func @transform_1(%arg0: i32) -> (i32, i32) {
    %c0_i32 = arith.constant 0 : i32
    %c0_i32_0 = arith.constant 0 : i32
    %c0_i32_1 = arith.constant 0 : i32
    return %c0_i32, %c0_i32_0 : i32, i32
  }
  func.func @transform_2(%arg0: i32) -> (i32, i32) {
    %c0_i32 = arith.constant 0 : i32
    %c0_i32_0 = arith.constant 0 : i32
    %c0_i32_1 = arith.constant 0 : i32
    return %c0_i32, %c0_i32_0 : i32, i32
  }
  func.func @transform_3(%arg0: i32) -> (i32, i32) {
    %c0_i32 = arith.constant 0 : i32
    %c0_i32_0 = arith.constant 0 : i32
    %c0_i32_1 = arith.constant 0 : i32
    return %c0_i32, %c0_i32_0 : i32, i32
  }
  func.func @transform_4(%arg0: i32) -> (i32, i32) {
    %c0_i32 = arith.constant 0 : i32
    %c0_i32_0 = arith.constant 0 : i32
    %c0_i32_1 = arith.constant 0 : i32
    return %c0_i32, %c0_i32_0 : i32, i32
  }
  func.func @transform_5(%arg0: i32) -> (i32, i32) {
    %c0_i32 = arith.constant 0 : i32
    %c0_i32_0 = arith.constant 0 : i32
    return %arg0, %c0_i32 : i32, i32
  }
}

</mosaic_0001>

<llo_original>
// kernel: fc_forward.1
$region0: #{fc_forward.1}
  #allocation0 [shape = 'u32[]', space=smem, size = 0x4, offset = 0x4, fixed_abs, tag = 'smem constant byte address 0x4 - core index']
  #allocation1 [shape = 'u32[144,128]{1,0:T(1,128)}', space=vmem, size = 0x12000, scoped, tag = 'internal scratch']
  %s0 = inlined_call_operand.hbm [shape: f32[16,561], index: 0, kind: input, shape index: {}]
  %s1 = inlined_call_operand.hbm [shape: bf16[561,256], index: 1, kind: input, shape index: {}]
  %s2 = inlined_call_operand.vmem [shape: f32[1,256], index: 2, kind: input, shape index: {}]
  %s3 = inlined_call_operand.hbm [shape: bf16[256,128], index: 3, kind: input, shape index: {}]
  %s4 = inlined_call_operand.vmem [shape: f32[1,128], index: 4, kind: input, shape index: {}]
  %s5 = inlined_call_operand.vmem [shape: bf16[16,128], index: 5, kind: output, shape index: {}]
  %s6 = sld [smem:[#allocation0]]
  $region42: #{fc_forward.1} parent=0
    _
  %s8 = ssub.s32 1, %s6
  %s9 = scalar_select 0, %s8, %s6
  $region1: #{fc_forward.1} parent=0
    #allocation2 [shape = 'u8[40960]{0}', space=vmem, size = 0xa000, scoped, tag = 'input window, operand 0, single buffered']
    #allocation3 [shape = 's32[1]{0}', space=sflag, size = 0x4, scoped, tag = 'scoped memory for fc_forward.1']
    #allocation4 [shape = 'u8[290816]{0}', space=vmem, size = 0x47000, scoped, tag = 'input window, operand 1, single buffered']
    #allocation5 [shape = 's32[1]{0}', space=sflag, size = 0x4, scoped, tag = 'scoped memory for fc_forward.1']
    #allocation6 [shape = 'u8[65536]{0}', space=vmem, size = 0x10000, scoped, tag = 'input window, operand 3, single buffered']
    %10 = vsyncpa [#allocation3], 0
    %11 = vsyncpa [#allocation5], 0
    // Predicated region
    $region2: #{fc_forward.1} parent=1 // pred_check
      _
    $region3: #{fc_forward.1} parent=1 // pred_check_branch
      %13 = sbr.rel (0) target = $region5
    $region4: #{fc_forward.1} parent=1 // pred_region
      %s15 = ssub.s32 1280, 1280
      %16 = vsyncadd [#allocation3], %s15
      %s17 = sshll.u32 [#allocation2], 4
      %s18 = int_to_ptr.vmem [resolvable:$true] %s17
      %23 = dma.hbm_to_vmem [thread:$0]  %s0, 1280, %s18, [#allocation3], 640, 640, 40
    $region5: #{fc_forward.1} parent=1 // pred_fallthru
      _
    // Predicated region
    $region6: #{fc_forward.1} parent=1 // pred_check
      _
    $region7: #{fc_forward.1} parent=1 // pred_check_branch
      %25 = sbr.rel (0) target = $region9
    $region8: #{fc_forward.1} parent=1 // pred_region
      %s27 = ssub.s32 9088, 9088
      %28 = vsyncadd [#allocation5], %s27
      %s29 = sshll.u32 [#allocation4], 4
      %s30 = int_to_ptr.vmem [resolvable:$true] %s29
      %35 = dma.hbm_to_vmem [thread:$0]  %s1, 9088, %s30, [#allocation5], 128, 128, 8
    $region9: #{fc_forward.1} parent=1 // pred_fallthru
      _
    // Predicated region
    $region10: #{fc_forward.1} parent=1 // pred_check
      _
    $region11: #{fc_forward.1} parent=1 // pred_check_branch
      %37 = sbr.rel (0) target = $region13
    $region12: #{fc_forward.1} parent=1 // pred_region
      _
    $region13: #{fc_forward.1} parent=1 // pred_fallthru
      _
    // Predicated region
    $region14: #{fc_forward.1} parent=1 // pred_check
      _
    $region15: #{fc_forward.1} parent=1 // pred_check_branch
      %39 = sbr.rel (0) target = $region17
    $region16: #{fc_forward.1} parent=1 // pred_region
      %s41 = ssub.s32 2048, 2048
      %42 = vsyncadd [#allocation5], %s41
      %s43 = sshll.u32 [#allocation6], 4
      %s44 = int_to_ptr.vmem [resolvable:$true] %s43
      %49 = dma.hbm_to_vmem [thread:$0]  %s3, 2048, %s44, [#allocation5], 64, 64, 4
    $region17: #{fc_forward.1} parent=1 // pred_fallthru
      _
    // Predicated region
    $region18: #{fc_forward.1} parent=1 // pred_check
      _
    $region19: #{fc_forward.1} parent=1 // pred_check_branch
      %51 = sbr.rel (0) target = $region21
    $region20: #{fc_forward.1} parent=1 // pred_region
      _
    $region21: #{fc_forward.1} parent=1 // pred_fallthru
      _
    // Predicated region
    $region22: #{fc_forward.1} parent=1 // pred_check
      _
    $region23: #{fc_forward.1} parent=1 // pred_check_branch
      %53 = sbr.rel (0) target = $region25
    $region24: #{fc_forward.1} parent=1 // pred_region
      %54 = dma.done [#allocation3], 1280
    $region25: #{fc_forward.1} parent=1 // pred_fallthru
      _
    // Predicated region
    $region26: #{fc_forward.1} parent=1 // pred_check
      _
    $region27: #{fc_forward.1} parent=1 // pred_check_branch
      %56 = sbr.rel (0) target = $region29
    $region28: #{fc_forward.1} parent=1 // pred_region
      %57 = dma.done [#allocation5], 9088
    $region29: #{fc_forward.1} parent=1 // pred_fallthru
      _
    // Predicated region
    $region30: #{fc_forward.1} parent=1 // pred_check
      _
    $region31: #{fc_forward.1} parent=1 // pred_check_branch
      %59 = sbr.rel (0) target = $region33
    $region32: #{fc_forward.1} parent=1 // pred_region
      %60 = dma.done [#allocation5], 2048
    $region33: #{fc_forward.1} parent=1 // pred_fallthru
      _
    %v62 = vld [vmem:[#allocation2] sm:$0xff]
    %v63 = vld [vmem:[#allocation2 + $0x8] sm:$0xff]
    %v64 = vld [vmem:[#allocation2 + $0x10] sm:$0xff]
    %v65 = vld [vmem:[#allocation2 + $0x18] sm:$0xff]
    %v66 = vld [vmem:[#allocation2 + $0x20] sm:$0xff]
    %v67 = vld [vmem:[#allocation2 + $0x28] sm:$0xff]
    %v68 = vld [vmem:[#allocation2 + $0x30] sm:$0xff]
    %v69 = vld [vmem:[#allocation2 + $0x38] sm:$0xff]
    %v70 = vld [vmem:[#allocation2 + $0x40] sm:$0xff]
    %v71 = vld [vmem:[#allocation2 + $0x48] sm:$0xff]
    %v72 = vpack.c.bf16 %v67, %v62
    %v73 = vpack.c.bf16 %v68, %v63
    %v74 = vpack.c.bf16 %v69, %v64
    %v75 = vpack.c.bf16 %v70, %v65
    %v76 = vpack.c.bf16 %v71, %v66
    %v77 = vld [vmem:[#allocation4] sm:$0xff]
    %v78 = vld [vmem:[#allocation4 + $0x8] sm:$0xff]
    %v79 = vld [vmem:[#allocation4 + $0x10] sm:$0xff]
    %v80 = vld [vmem:[#allocation4 + $0x18] sm:$0xff]
    %v81 = vld [vmem:[#allocation4 + $0x20] sm:$0xff]
    %v82 = vld [vmem:[#allocation4 + $0x28] sm:$0xff]
    %v83 = vld [vmem:[#allocation4 + $0x30] sm:$0xff]
    %v84 = vld [vmem:[#allocation4 + $0x38] sm:$0xff]
    %v85 = vld [vmem:[#allocation4 + $0x40] sm:$0xff]
    %v86 = vld [vmem:[#allocation4 + $0x48] sm:$0xff]
    %v87 = vld [vmem:[#allocation4 + $0x50] sm:$0xff]
    %v88 = vld [vmem:[#allocation4 + $0x58] sm:$0xff]
    %v89 = vld [vmem:[#allocation4 + $0x60] sm:$0xff]
    %v90 = vld [vmem:[#allocation4 + $0x68] sm:$0xff]
    %v91 = vld [vmem:[#allocation4 + $0x70] sm:$0xff]
    %v92 = vld [vmem:[#allocation4 + $0x78] sm:$0xff]
    %v93 = vld [vmem:[#allocation4 + $0x80] sm:$0xff]
    %v94 = vld [vmem:[#allocation4 + $0x88] sm:$0xff]
    %v95 = vld [vmem:[#allocation4 + $0x90] sm:$0xff]
    %v96 = vld [vmem:[#allocation4 + $0x98] sm:$0xff]
    %v97 = vld [vmem:[#allocation4 + $0xa0] sm:$0xff]
    %v98 = vld [vmem:[#allocation4 + $0xa8] sm:$0xff]
    %v99 = vld [vmem:[#allocation4 + $0xb0] sm:$0xff]
    %v100 = vld [vmem:[#allocation4 + $0xb8] sm:$0xff]
    %v101 = vld [vmem:[#allocation4 + $0xc0] sm:$0xff]
    %v102 = vld [vmem:[#allocation4 + $0xc8] sm:$0xff]
    %v103 = vld [vmem:[#allocation4 + $0xd0] sm:$0xff]
    %v104 = vld [vmem:[#allocation4 + $0xd8] sm:$0xff]
    %v105 = vld [vmem:[#allocation4 + $0xe0] sm:$0xff]
    %v106 = vld [vmem:[#allocation4 + $0xe8] sm:$0xff]
    %v107 = vld [vmem:[#allocation4 + $0xf0] sm:$0xff]
    %v108 = vld [vmem:[#allocation4 + $0xf8] sm:$0xff]
    %v109 = vld [vmem:[#allocation4 + $0x100] sm:$0xff]
    %v110 = vld [vmem:[#allocation4 + $0x108] sm:$0xff]
    %v111 = vld [vmem:[#allocation4 + $0x110] sm:$0xff]
    %v112 = vld [vmem:[#allocation4 + $0x118] sm:$0xff]
    %v113 = vld [vmem:[#allocation4 + $0x120] sm:$0xff]
    %v114 = vld [vmem:[#allocation4 + $0x128] sm:$0xff]
    %v115 = vld [vmem:[#allocation4 + $0x130] sm:$0xff]
    %v116 = vld [vmem:[#allocation4 + $0x138] sm:$0xff]
    %v117 = vld [vmem:[#allocation4 + $0x140] sm:$0xff]
    %v118 = vld [vmem:[#allocation4 + $0x148] sm:$0xff]
    %v119 = vld [vmem:[#allocation4 + $0x150] sm:$0xff]
    %v120 = vld [vmem:[#allocation4 + $0x158] sm:$0xff]
    %v121 = vld [vmem:[#allocation4 + $0x160] sm:$0xff]
    %v122 = vld [vmem:[#allocation4 + $0x168] sm:$0xff]
    %v123 = vld [vmem:[#allocation4 + $0x170] sm:$0xff]
    %v124 = vld [vmem:[#allocation4 + $0x178] sm:$0xff]
    %v125 = vld [vmem:[#allocation4 + $0x180] sm:$0xff]
    %v126 = vld [vmem:[#allocation4 + $0x188] sm:$0xff]
    %v127 = vld [vmem:[#allocation4 + $0x190] sm:$0xff]
    %v128 = vld [vmem:[#allocation4 + $0x198] sm:$0xff]
    %v129 = vld [vmem:[#allocation4 + $0x1a0] sm:$0xff]
    %v130 = vld [vmem:[#allocation4 + $0x1a8] sm:$0xff]
    %v131 = vld [vmem:[#allocation4 + $0x1b0] sm:$0xff]
    %v132 = vld [vmem:[#allocation4 + $0x1b8] sm:$0xff]
    %v133 = vld [vmem:[#allocation4 + $0x1c0] sm:$0xff]
    %v134 = vld [vmem:[#allocation4 + $0x1c8] sm:$0xff]
    %v135 = vld [vmem:[#allocation4 + $0x1d0] sm:$0xff]
    %v136 = vld [vmem:[#allocation4 + $0x1d8] sm:$0xff]
    %v137 = vld [vmem:[#allocation4 + $0x1e0] sm:$0xff]
    %v138 = vld [vmem:[#allocation4 + $0x1e8] sm:$0xff]
    %v139 = vld [vmem:[#allocation4 + $0x1f0] sm:$0xff]
    %v140 = vld [vmem:[#allocation4 + $0x1f8] sm:$0xff]
    %v141 = vld [vmem:[#allocation4 + $0x200] sm:$0xff]
    %v142 = vld [vmem:[#allocation4 + $0x208] sm:$0xff]
    %v143 = vld [vmem:[#allocation4 + $0x210] sm:$0xff]
    %v144 = vld [vmem:[#allocation4 + $0x218] sm:$0xff]
    %v145 = vld [vmem:[#allocation4 + $0x220] sm:$0xff]
    %v146 = vld [vmem:[#allocation4 + $0x228] sm:$0xff]
    %v147 = vld [vmem:[#allocation4 + $0x230] sm:$0x11]
    %v148 = vld [vmem:[%s2] sm:$0x3]
    %v150 = vlaneseq
    %v151 = vshrl.u32 %v150, 7
    %v152 = vsub.s32 0, %v151
    %v153 = vrot.slane %v148, %v152
    %v154 = vlaneseq
    %v155 = vshrl.u32 %v154, 7
    %v156 = vsub.s32 1, %v155
    %v157 = vrot.slane %v148, %v156
    %v231 = vunpack.c.l.b16 %v77
    %v232 = vunpack.c.h.b16 %v77
    %v233 = vunpack.c.l.b16 %v78
    %v234 = vunpack.c.h.b16 %v78
    %v235 = vunpack.c.l.b16 %v79
    %v236 = vunpack.c.h.b16 %v79
    %v237 = vunpack.c.l.b16 %v80
    %v238 = vunpack.c.h.b16 %v80
    %v239 = vunpack.c.l.b16 %v81
    %v240 = vunpack.c.h.b16 %v81
    %v241 = vunpack.c.l.b16 %v82
    %v242 = vunpack.c.h.b16 %v82
    %v243 = vunpack.c.l.b16 %v83
    %v244 = vunpack.c.h.b16 %v83
    %v245 = vunpack.c.l.b16 %v84
    %v246 = vunpack.c.h.b16 %v84
    %v247 = vunpack.c.l.b16 %v85
    %v248 = vunpack.c.h.b16 %v85
    %v249 = vunpack.c.l.b16 %v86
    %v250 = vunpack.c.h.b16 %v86
    %v251 = vunpack.c.l.b16 %v87
    %v252 = vunpack.c.h.b16 %v87
    %v253 = vunpack.c.l.b16 %v88
    %v254 = vunpack.c.h.b16 %v88
    %v255 = vunpack.c.l.b16 %v89
    %v256 = vunpack.c.h.b16 %v89
    %v257 = vunpack.c.l.b16 %v90
    %v258 = vunpack.c.h.b16 %v90
    %v259 = vunpack.c.l.b16 %v91
    %v260 = vunpack.c.h.b16 %v91
    %v261 = vunpack.c.l.b16 %v92
    %v262 = vunpack.c.h.b16 %v92
    %v263 = vunpack.c.l.b16 %v93
    %v264 = vunpack.c.h.b16 %v93
    %v265 = vunpack.c.l.b16 %v94
    %v266 = vunpack.c.h.b16 %v94
    %v267 = vunpack.c.l.b16 %v95
    %v268 = vunpack.c.h.b16 %v95
    %v269 = vunpack.c.l.b16 %v96
    %v270 = vunpack.c.h.b16 %v96
    %v271 = vunpack.c.l.b16 %v97
    %v272 = vunpack.c.h.b16 %v97
    %v273 = vunpack.c.l.b16 %v98
    %v274 = vunpack.c.h.b16 %v98
    %v275 = vunpack.c.l.b16 %v99
    %v276 = vunpack.c.h.b16 %v99
    %v277 = vunpack.c.l.b16 %v100
    %v278 = vunpack.c.h.b16 %v100
    %v279 = vunpack.c.l.b16 %v101
    %v280 = vunpack.c.h.b16 %v101
    %v281 = vunpack.c.l.b16 %v102
    %v282 = vunpack.c.h.b16 %v102
    %v283 = vunpack.c.l.b16 %v103
    %v284 = vunpack.c.h.b16 %v103
    %v285 = vunpack.c.l.b16 %v104
    %v286 = vunpack.c.h.b16 %v104
    %v287 = vunpack.c.l.b16 %v105
    %v288 = vunpack.c.h.b16 %v105
    %v289 = vunpack.c.l.b16 %v106
    %v290 = vunpack.c.h.b16 %v106
    %v291 = vunpack.c.l.b16 %v107
    %v292 = vunpack.c.h.b16 %v107
    %v293 = vunpack.c.l.b16 %v108
    %v294 = vunpack.c.h.b16 %v108
    %v295 = vunpack.c.l.b16 %v109
    %v296 = vunpack.c.h.b16 %v109
    %v297 = vunpack.c.l.b16 %v110
    %v298 = vunpack.c.h.b16 %v110
    %v299 = vunpack.c.l.b16 %v111
    %v300 = vunpack.c.h.b16 %v111
    %v301 = vunpack.c.l.b16 %v112
    %v302 = vunpack.c.h.b16 %v112
    %v303 = vunpack.c.l.b16 %v113
    %v304 = vunpack.c.h.b16 %v113
    %v305 = vunpack.c.l.b16 %v114
    %v306 = vunpack.c.h.b16 %v114
    %v307 = vunpack.c.l.b16 %v115
    %v308 = vunpack.c.h.b16 %v115
    %v309 = vunpack.c.l.b16 %v116
    %v310 = vunpack.c.h.b16 %v116
    %v311 = vunpack.c.l.b16 %v117
    %v312 = vunpack.c.h.b16 %v117
    %v313 = vunpack.c.l.b16 %v118
    %v314 = vunpack.c.h.b16 %v118
    %v315 = vunpack.c.l.b16 %v119
    %v316 = vunpack.c.h.b16 %v119
    %v317 = vunpack.c.l.b16 %v120
    %v318 = vunpack.c.h.b16 %v120
    %v319 = vunpack.c.l.b16 %v121
    %v320 = vunpack.c.h.b16 %v121
    %v321 = vunpack.c.l.b16 %v122
    %v322 = vunpack.c.h.b16 %v122
    %v323 = vunpack.c.l.b16 %v123
    %v324 = vunpack.c.h.b16 %v123
    %v325 = vunpack.c.l.b16 %v124
    %v326 = vunpack.c.h.b16 %v124
    %v327 = vunpack.c.l.b16 %v125
    %v328 = vunpack.c.h.b16 %v125
    %v329 = vunpack.c.l.b16 %v126
    %v330 = vunpack.c.h.b16 %v126
    %v331 = vunpack.c.l.b16 %v127
    %v332 = vunpack.c.h.b16 %v127
    %v333 = vunpack.c.l.b16 %v128
    %v334 = vunpack.c.h.b16 %v128
    %v335 = vunpack.c.l.b16 %v129
    %v336 = vunpack.c.h.b16 %v129
    %v337 = vunpack.c.l.b16 %v130
    %v338 = vunpack.c.h.b16 %v130
    %v339 = vunpack.c.l.b16 %v131
    %v340 = vunpack.c.h.b16 %v131
    %v341 = vunpack.c.l.b16 %v132
    %v342 = vunpack.c.h.b16 %v132
    %v343 = vunpack.c.l.b16 %v133
    %v344 = vunpack.c.h.b16 %v133
    %v345 = vunpack.c.l.b16 %v134
    %v346 = vunpack.c.h.b16 %v134
    %v347 = vunpack.c.l.b16 %v135
    %v348 = vunpack.c.h.b16 %v135
    %v349 = vunpack.c.l.b16 %v136
    %v350 = vunpack.c.h.b16 %v136
    %v351 = vunpack.c.l.b16 %v137
    %v352 = vunpack.c.h.b16 %v137
    %v353 = vunpack.c.l.b16 %v138
    %v354 = vunpack.c.h.b16 %v138
    %v355 = vunpack.c.l.b16 %v139
    %v356 = vunpack.c.h.b16 %v139
    %v357 = vunpack.c.l.b16 %v140
    %v358 = vunpack.c.h.b16 %v140
    %v359 = vunpack.c.l.b16 %v141
    %v360 = vunpack.c.h.b16 %v141
    %v361 = vunpack.c.l.b16 %v142
    %v362 = vunpack.c.h.b16 %v142
    %v363 = vunpack.c.l.b16 %v143
    %v364 = vunpack.c.h.b16 %v143
    %v365 = vunpack.c.l.b16 %v144
    %v366 = vunpack.c.h.b16 %v144
    %v367 = vunpack.c.l.b16 %v145
    %v368 = vunpack.c.h.b16 %v145
    %v369 = vunpack.c.l.b16 %v146
    %v370 = vunpack.c.h.b16 %v146
    %v371 = vunpack.c.l.b16 %v147
    %v372 = vunpack.c.h.b16 %v147
    %v373 = vpack.c.b16 %v233, %v231
    %v374 = vpack.c.b16 %v234, %v232
    %v375 = vpack.c.b16 %v237, %v235
    %v376 = vpack.c.b16 %v238, %v236
    %v377 = vpack.c.b16 %v241, %v239
    %v378 = vpack.c.b16 %v242, %v240
    %v379 = vpack.c.b16 %v245, %v243
    %v380 = vpack.c.b16 %v246, %v244
    %v381 = vpack.c.b16 %v249, %v247
    %v382 = vpack.c.b16 %v250, %v248
    %v383 = vpack.c.b16 %v253, %v251
    %v384 = vpack.c.b16 %v254, %v252
    %v385 = vpack.c.b16 %v257, %v255
    %v386 = vpack.c.b16 %v258, %v256
    %v387 = vpack.c.b16 %v261, %v259
    %v388 = vpack.c.b16 %v262, %v260
    %v389 = vpack.c.b16 %v265, %v263
    %v390 = vpack.c.b16 %v266, %v264
    %v391 = vpack.c.b16 %v269, %v267
    %v392 = vpack.c.b16 %v270, %v268
    %v393 = vpack.c.b16 %v273, %v271
    %v394 = vpack.c.b16 %v274, %v272
    %v395 = vpack.c.b16 %v277, %v275
    %v396 = vpack.c.b16 %v278, %v276
    %v397 = vpack.c.b16 %v281, %v279
    %v398 = vpack.c.b16 %v282, %v280
    %v399 = vpack.c.b16 %v285, %v283
    %v400 = vpack.c.b16 %v286, %v284
    %v401 = vpack.c.b16 %v289, %v287
    %v402 = vpack.c.b16 %v290, %v288
    %v403 = vpack.c.b16 %v293, %v291
    %v404 = vpack.c.b16 %v294, %v292
    %v405 = vpack.c.b16 %v297, %v295
    %v406 = vpack.c.b16 %v298, %v296
    %v407 = vpack.c.b16 %v301, %v299
    %v408 = vpack.c.b16 %v302, %v300
    %v409 = vpack.c.b16 %v305, %v303
    %v410 = vpack.c.b16 %v306, %v304
    %v411 = vpack.c.b16 %v309, %v307
    %v412 = vpack.c.b16 %v310, %v308
    %v413 = vpack.c.b16 %v313, %v311
    %v414 = vpack.c.b16 %v314, %v312
    %v415 = vpack.c.b16 %v317, %v315
    %v416 = vpack.c.b16 %v318, %v316
    %v417 = vpack.c.b16 %v321, %v319
    %v418 = vpack.c.b16 %v322, %v320
    %v419 = vpack.c.b16 %v325, %v323
    %v420 = vpack.c.b16 %v326, %v324
    %v421 = vpack.c.b16 %v329, %v327
    %v422 = vpack.c.b16 %v330, %v328
    %v423 = vpack.c.b16 %v333, %v331
    %v424 = vpack.c.b16 %v334, %v332
    %v425 = vpack.c.b16 %v337, %v335
    %v426 = vpack.c.b16 %v338, %v336
    %v427 = vpack.c.b16 %v341, %v339
    %v428 = vpack.c.b16 %v342, %v340
    %v429 = vpack.c.b16 %v345, %v343
    %v430 = vpack.c.b16 %v346, %v344
    %v431 = vpack.c.b16 %v349, %v347
    %v432 = vpack.c.b16 %v350, %v348
    %v433 = vpack.c.b16 %v353, %v351
    %v434 = vpack.c.b16 %v354, %v352
    %v435 = vpack.c.b16 %v357, %v355
    %v436 = vpack.c.b16 %v358, %v356
    %v437 = vpack.c.b16 %v361, %v359
    %v438 = vpack.c.b16 %v362, %v360
    %v439 = vpack.c.b16 %v365, %v363
    %v440 = vpack.c.b16 %v366, %v364
    %v441 = vpack.c.b16 %v369, %v367
    %v442 = vpack.c.b16 %v370, %v368
    %v443 = vpack.c.b16 %v371, %v371
    %v444 = vpack.c.b16 %v372, %v372
    %vm515 = vcmask 400384
    %v517 = vsel %vm515, %v76, 0
    %vm519 = vcmask 1040384
    %v520 = vsel 0, 4294967295, 65535
    %v521 = vsel %vm519, %v520, 0
    %v523 = vand.u32 %v443, %v521
    %v526 = vand.u32 %v444, %v521
    %528 = vmatprep.subr.bf16.mxu0 %v374
    %529 = vmatpush1.bf16.msra.mxu0 %v373
    %530 = vmatprep.subr.bf16.mxu0 %v376
    %531 = vmatpush1.bf16.msra.mxu0 %v375
    %532 = vmatprep.subr.bf16.mxu0 %v378
    %533 = vmatpush1.bf16.msra.mxu0 %v377
    %534 = vmatprep.subr.bf16.mxu0 %v380
    %535 = vmatpush1.bf16.msra.mxu0 %v379
    %536 = vmatprep.subr.bf16.mxu0 %v382
    %537 = vmatpush1.bf16.msra.mxu0 %v381
    %538 = vmatprep.subr.bf16.mxu0 %v384
    %539 = vmatpush1.bf16.msra.mxu0 %v383
    %540 = vmatprep.subr.bf16.mxu0 %v386
    %541 = vmatpush1.bf16.msra.mxu0 %v385
    %542 = vmatprep.subr.bf16.mxu0 %v388
    %543 = vmatpush1.bf16.msra.mxu0 %v387
    %544 = vmatprep.subr.bf16.mxu0 %v390
    %545 = vmatpush1.bf16.msra.mxu0 %v389
    %546 = vmatprep.subr.bf16.mxu0 %v392
    %547 = vmatpush1.bf16.msra.mxu0 %v391
    %548 = vmatprep.subr.bf16.mxu0 %v394
    %549 = vmatpush1.bf16.msra.mxu0 %v393
    %550 = vmatprep.subr.bf16.mxu0 %v396
    %551 = vmatpush1.bf16.msra.mxu0 %v395
    %552 = vmatprep.subr.bf16.mxu0 %v398
    %553 = vmatpush1.bf16.msra.mxu0 %v397
    %554 = vmatprep.subr.bf16.mxu0 %v400
    %555 = vmatpush1.bf16.msra.mxu0 %v399
    %556 = vmatprep.subr.bf16.mxu0 %v402
    %557 = vmatpush1.bf16.msra.mxu0 %v401
    %558 = vmatprep.subr.bf16.mxu0 %v404
    %559 = vmatpush1.bf16.msra.mxu0 %v403
    %560 = vmatprep.mubr.bf16.mxu0 %v73
    %561 = vmatmul.mubr.bf16.gmra.mrb[0].mxu0 %v72
    %v562 = vpop.f32.mrb[0].mxu0
    %v563 = vadd.f32 %v153, %v562
    %v564 = vpop.f32.mrb[0].mxu0
    %v565 = vadd.f32 %v157, %v564
    %v566 = vpop.f32.mrb[0].mxu0
    %v567 = vadd.f32 %v153, %v566
    %v568 = vpop.f32.mrb[0].mxu0
    %v569 = vadd.f32 %v157, %v568
    %570 = vdwg.mxu0
    %571 = vmatprep.subr.bf16.mxu0 %v406
    %572 = vmatpush1.bf16.msra.mxu0 %v405
    %573 = vmatprep.subr.bf16.mxu0 %v408
    %574 = vmatpush1.bf16.msra.mxu0 %v407
    %575 = vmatprep.subr.bf16.mxu0 %v410
    %576 = vmatpush1.bf16.msra.mxu0 %v409
    %577 = vmatprep.subr.bf16.mxu0 %v412
    %578 = vmatpush1.bf16.msra.mxu0 %v411
    %579 = vmatprep.subr.bf16.mxu0 %v414
    %580 = vmatpush1.bf16.msra.mxu0 %v413
    %581 = vmatprep.subr.bf16.mxu0 %v416
    %582 = vmatpush1.bf16.msra.mxu0 %v415
    %583 = vmatprep.subr.bf16.mxu0 %v418
    %584 = vmatpush1.bf16.msra.mxu0 %v417
    %585 = vmatprep.subr.bf16.mxu0 %v420
    %586 = vmatpush1.bf16.msra.mxu0 %v419
    %587 = vmatprep.subr.bf16.mxu0 %v422
    %588 = vmatpush1.bf16.msra.mxu0 %v421
    %589 = vmatprep.subr.bf16.mxu0 %v424
    %590 = vmatpush1.bf16.msra.mxu0 %v423
    %591 = vmatprep.subr.bf16.mxu0 %v426
    %592 = vmatpush1.bf16.msra.mxu0 %v425
    %593 = vmatprep.subr.bf16.mxu0 %v428
    %594 = vmatpush1.bf16.msra.mxu0 %v427
    %595 = vmatprep.subr.bf16.mxu0 %v430
    %596 = vmatpush1.bf16.msra.mxu0 %v429
    %597 = vmatprep.subr.bf16.mxu0 %v432
    %598 = vmatpush1.bf16.msra.mxu0 %v431
    %599 = vmatprep.subr.bf16.mxu0 %v434
    %600 = vmatpush1.bf16.msra.mxu0 %v433
    %601 = vmatprep.subr.bf16.mxu0 %v436
    %602 = vmatpush1.bf16.msra.mxu0 %v435
    %603 = vmatprep.mubr.bf16.mxu0 %v75
    %604 = vmatmul.mubr.bf16.gmra.mrb[0].mxu0 %v74
    %v605 = vpop.f32.mrb[0].mxu0
    %v606 = vadd.f32 %v563, %v605
    %v607 = vpop.f32.mrb[0].mxu0
    %v608 = vadd.f32 %v565, %v607
    %v609 = vpop.f32.mrb[0].mxu0
    %v610 = vadd.f32 %v567, %v609
    %v611 = vpop.f32.mrb[0].mxu0
    %v612 = vadd.f32 %v569, %v611
    %613 = vdwg.mxu0
    %614 = vmatprep.subr.bf16.mxu0 %v438
    %615 = vmatpush1.bf16.msra.mxu0 %v437
    %616 = vmatprep.subr.bf16.mxu0 %v440
    %617 = vmatpush1.bf16.msra.mxu0 %v439
    %618 = vmatprep.subr.bf16.mxu0 %v442
    %619 = vmatpush1.bf16.msra.mxu0 %v441
    %620 = vmatprep.subr.bf16.mxu0 %v526
    %621 = vmatpush1.bf16.msra.mxu0 %v523
    %622 = vmatprep.subr.bf16.mxu0 0
    %623 = vmatpush1.bf16.msra.mxu0 0
    %624 = vmatprep.subr.bf16.mxu0 0
    %625 = vmatpush1.bf16.msra.mxu0 0
    %626 = vmatprep.subr.bf16.mxu0 0
    %627 = vmatpush1.bf16.msra.mxu0 0
    %628 = vmatprep.subr.bf16.mxu0 0
    %629 = vmatpush1.bf16.msra.mxu0 0
    %630 = vmatprep.subr.bf16.mxu0 0
    %631 = vmatpush1.bf16.msra.mxu0 0
    %632 = vmatprep.subr.bf16.mxu0 0
    %633 = vmatpush1.bf16.msra.mxu0 0
    %634 = vmatprep.subr.bf16.mxu0 0
    %635 = vmatpush1.bf16.msra.mxu0 0
    %636 = vmatprep.subr.bf16.mxu0 0
    %637 = vmatpush1.bf16.msra.mxu0 0
    %638 = vmatprep.subr.bf16.mxu0 0
    %639 = vmatpush1.bf16.msra.mxu0 0
    %640 = vmatprep.subr.bf16.mxu0 0
    %641 = vmatpush1.bf16.msra.mxu0 0
    %642 = vmatprep.subr.bf16.mxu0 0
    %643 = vmatpush1.bf16.msra.mxu0 0
    %644 = vmatprep.subr.bf16.mxu0 0
    %645 = vmatpush1.bf16.msra.mxu0 0
    %646 = vmatprep.mubr.bf16.mxu0 0
    %647 = vmatmul.mubr.bf16.gmra.mrb[0].mxu0 %v517
    %v648 = vpop.f32.mrb[0].mxu0
    %v649 = vadd.f32 %v606, %v648
    %v650 = vpop.f32.mrb[0].mxu0
    %v651 = vadd.f32 %v608, %v650
    %v652 = vpop.f32.mrb[0].mxu0
    %v653 = vadd.f32 %v610, %v652
    %v654 = vpop.f32.mrb[0].mxu0
    %v655 = vadd.f32 %v612, %v654
    %656 = vdwg.mxu0
    %v657 = vtanh.pop %v649
    %v658 = vtanh.pop %v651
    %v659 = vtanh.pop %v653
    %v660 = vtanh.pop %v655
    %v661 = vpack.c.bf16 %v659, %v657
    %v662 = vpack.c.bf16 %v660, %v658
    %v663 = vld [vmem:[#allocation6] sm:$0xf]
    %v664 = vld [vmem:[#allocation6 + $0x4] sm:$0xf]
    %v665 = vld [vmem:[#allocation6 + $0x8] sm:$0xf]
    %v666 = vld [vmem:[#allocation6 + $0xc] sm:$0xf]
    %v667 = vld [vmem:[#allocation6 + $0x10] sm:$0xf]
    %v668 = vld [vmem:[#allocation6 + $0x14] sm:$0xf]
    %v669 = vld [vmem:[#allocation6 + $0x18] sm:$0xf]
    %v670 = vld [vmem:[#allocation6 + $0x1c] sm:$0xf]
    %v671 = vld [vmem:[#allocation6 + $0x20] sm:$0xf]
    %v672 = vld [vmem:[#allocation6 + $0x24] sm:$0xf]
    %v673 = vld [vmem:[#allocation6 + $0x28] sm:$0xf]
    %v674 = vld [vmem:[#allocation6 + $0x2c] sm:$0xf]
    %v675 = vld [vmem:[#allocation6 + $0x30] sm:$0xf]
    %v676 = vld [vmem:[#allocation6 + $0x34] sm:$0xf]
    %v677 = vld [vmem:[#allocation6 + $0x38] sm:$0xf]
    %v678 = vld [vmem:[#allocation6 + $0x3c] sm:$0xf]
    %v679 = vld [vmem:[#allocation6 + $0x40] sm:$0xf]
    %v680 = vld [vmem:[#allocation6 + $0x44] sm:$0xf]
    %v681 = vld [vmem:[#allocation6 + $0x48] sm:$0xf]
    %v682 = vld [vmem:[#allocation6 + $0x4c] sm:$0xf]
    %v683 = vld [vmem:[#allocation6 + $0x50] sm:$0xf]
    %v684 = vld [vmem:[#allocation6 + $0x54] sm:$0xf]
    %v685 = vld [vmem:[#allocation6 + $0x58] sm:$0xf]
    %v686 = vld [vmem:[#allocation6 + $0x5c] sm:$0xf]
    %v687 = vld [vmem:[#allocation6 + $0x60] sm:$0xf]
    %v688 = vld [vmem:[#allocation6 + $0x64] sm:$0xf]
    %v689 = vld [vmem:[#allocation6 + $0x68] sm:$0xf]
    %v690 = vld [vmem:[#allocation6 + $0x6c] sm:$0xf]
    %v691 = vld [vmem:[#allocation6 + $0x70] sm:$0xf]
    %v692 = vld [vmem:[#allocation6 + $0x74] sm:$0xf]
    %v693 = vld [vmem:[#allocation6 + $0x78] sm:$0xf]
    %v694 = vld [vmem:[#allocation6 + $0x7c] sm:$0xf]
    %v695 = vld [vmem:[%s4] sm:$0x1]
    %v697 = vlaneseq
    %v698 = vshrl.u32 %v697, 7
    %v699 = vsub.s32 0, %v698
    %v700 = vrot.slane %v695, %v699
    %v734 = vunpack.c.l.b16 %v663
    %v735 = vunpack.c.l.b16 %v664
    %v736 = vunpack.c.l.b16 %v665
    %v737 = vunpack.c.l.b16 %v666
    %v738 = vunpack.c.l.b16 %v667
    %v739 = vunpack.c.l.b16 %v668
    %v740 = vunpack.c.l.b16 %v669
    %v741 = vunpack.c.l.b16 %v670
    %v742 = vunpack.c.l.b16 %v671
    %v743 = vunpack.c.l.b16 %v672
    %v744 = vunpack.c.l.b16 %v673
    %v745 = vunpack.c.l.b16 %v674
    %v746 = vunpack.c.l.b16 %v675
    %v747 = vunpack.c.l.b16 %v676
    %v748 = vunpack.c.l.b16 %v677
    %v749 = vunpack.c.l.b16 %v678
    %v750 = vunpack.c.l.b16 %v679
    %v751 = vunpack.c.l.b16 %v680
    %v752 = vunpack.c.l.b16 %v681
    %v753 = vunpack.c.l.b16 %v682
    %v754 = vunpack.c.l.b16 %v683
    %v755 = vunpack.c.l.b16 %v684
    %v756 = vunpack.c.l.b16 %v685
    %v757 = vunpack.c.l.b16 %v686
    %v758 = vunpack.c.l.b16 %v687
    %v759 = vunpack.c.l.b16 %v688
    %v760 = vunpack.c.l.b16 %v689
    %v761 = vunpack.c.l.b16 %v690
    %v762 = vunpack.c.l.b16 %v691
    %v763 = vunpack.c.l.b16 %v692
    %v764 = vunpack.c.l.b16 %v693
    %v765 = vunpack.c.l.b16 %v694
    %v766 = vpack.c.b16 %v735, %v734
    %v767 = vpack.c.b16 %v737, %v736
    %v768 = vpack.c.b16 %v739, %v738
    %v769 = vpack.c.b16 %v741, %v740
    %v770 = vpack.c.b16 %v743, %v742
    %v771 = vpack.c.b16 %v745, %v744
    %v772 = vpack.c.b16 %v747, %v746
    %v773 = vpack.c.b16 %v749, %v748
    %v774 = vpack.c.b16 %v751, %v750
    %v775 = vpack.c.b16 %v753, %v752
    %v776 = vpack.c.b16 %v755, %v754
    %v777 = vpack.c.b16 %v757, %v756
    %v778 = vpack.c.b16 %v759, %v758
    %v779 = vpack.c.b16 %v761, %v760
    %v780 = vpack.c.b16 %v763, %v762
    %v781 = vpack.c.b16 %v765, %v764
    %798 = vmatprep.subr.bf16.mxu0 0
    %799 = vmatpush1.bf16.msra.mxu0 %v766
    %800 = vmatprep.subr.bf16.mxu0 0
    %801 = vmatpush1.bf16.msra.mxu0 %v767
    %802 = vmatprep.subr.bf16.mxu0 0
    %803 = vmatpush1.bf16.msra.mxu0 %v768
    %804 = vmatprep.subr.bf16.mxu0 0
    %805 = vmatpush1.bf16.msra.mxu0 %v769
    %806 = vmatprep.subr.bf16.mxu0 0
    %807 = vmatpush1.bf16.msra.mxu0 %v770
    %808 = vmatprep.subr.bf16.mxu0 0
    %809 = vmatpush1.bf16.msra.mxu0 %v771
    %810 = vmatprep.subr.bf16.mxu0 0
    %811 = vmatpush1.bf16.msra.mxu0 %v772
    %812 = vmatprep.subr.bf16.mxu0 0
    %813 = vmatpush1.bf16.msra.mxu0 %v773
    %814 = vmatprep.subr.bf16.mxu0 0
    %815 = vmatpush1.bf16.msra.mxu0 %v774
    %816 = vmatprep.subr.bf16.mxu0 0
    %817 = vmatpush1.bf16.msra.mxu0 %v775
    %818 = vmatprep.subr.bf16.mxu0 0
    %819 = vmatpush1.bf16.msra.mxu0 %v776
    %820 = vmatprep.subr.bf16.mxu0 0
    %821 = vmatpush1.bf16.msra.mxu0 %v777
    %822 = vmatprep.subr.bf16.mxu0 0
    %823 = vmatpush1.bf16.msra.mxu0 %v778
    %824 = vmatprep.subr.bf16.mxu0 0
    %825 = vmatpush1.bf16.msra.mxu0 %v779
    %826 = vmatprep.subr.bf16.mxu0 0
    %827 = vmatpush1.bf16.msra.mxu0 %v780
    %828 = vmatprep.subr.bf16.mxu0 0
    %829 = vmatpush1.bf16.msra.mxu0 %v781
    %830 = vmatprep.mubr.bf16.mxu0 %v662
    %831 = vmatmul.mubr.bf16.gmra.mrb[0].mxu0 %v661
    %v832 = vpop.f32.mrb[0].mxu0
    %v833 = vadd.f32 %v700, %v832
    %v834 = vpop.f32.mrb[0].mxu0
    %v835 = vpop.f32.mrb[0].mxu0
    %v836 = vadd.f32 %v700, %v835
    %v837 = vpop.f32.mrb[0].mxu0
    %838 = vdwg.mxu0
    %v839 = vpack.c.bf16 %v836, %v833
    %v841 = vunpack.c.l.b16 %v839
    %v842 = vunpack.c.h.b16 %v839
    %v843 = vpack.c.b16 %v841, %v841
    %v844 = vpack.c.b16 %v842, %v842
    %847 = vst [vmem:[%s5] sm:$0xf] %v843
    %848 = vst [vmem:[%s5 + $0x4] sm:$0xf] %v844
    // Predicated region
    $region34: #{fc_forward.1} parent=1 // pred_check
      _
    $region35: #{fc_forward.1} parent=1 // pred_check_branch
      %850 = sbr.rel (0) target = $region37
    $region36: #{fc_forward.1} parent=1 // pred_region
      _
    $region37: #{fc_forward.1} parent=1 // pred_fallthru
      _
    // Predicated region
    $region38: #{fc_forward.1} parent=1 // pred_check
      _
    $region39: #{fc_forward.1} parent=1 // pred_check_branch
      %852 = sbr.rel (0) target = $region41
    $region40: #{fc_forward.1} parent=1 // pred_region
      _
    $region41: #{fc_forward.1} parent=1 // pred_fallthru
      _
    %853 = vsyncpa [#allocation3], 1
    %854 = vsyncpa [#allocation5], 1

</llo_original>
